<compile_context>
chip_gen: v6e
topology: v6e:2x2x1
jax: 0.10.0
libtpu: 0.0.40
codegen_flags: <defaults>
</compile_context>

<pallas_src>
import math

import jax
import jax.numpy as jnp
from jax.experimental import pallas as pl
from jax.experimental.pallas import tpu as pltpu

EPS = 1e-16          # matches DropNorm.eps
P_DROP = 0.5
INV_P = 1.0 / P_DROP


def _round_up(v, m):
    return ((v + m - 1) // m) * m


def _make_dropnorm_kernel(training: bool):
    """x block: (Bt, F) or (Bt, 8, F/8). params block: stacked rows, same trailing dims.

    training=True : params rows = [mask/p, gamma*mask, beta*mask]
    training=False: params rows = [gamma, beta]
    """

    def kernel(x_ref, p_ref, o_ref):
        x = x_ref[...].astype(jnp.float32)
        if training:
            x = x * p_ref[0:1]                 # dropout: x * mask / p (pre-scaled in glue)
            g, b = p_ref[1:2], p_ref[2:3]      # post-mask folded into gamma/beta
        else:
            g, b = p_ref[0:1], p_ref[1:2]

        n = math.prod(x.shape[1:])             # static: full feature count per sample
        inv_n = 1.0 / n

        # Two-pass mean / variance on the VMEM-resident tile (no cancellation hazard).
        s = jnp.sum(x, axis=-1, keepdims=True)
        if x.ndim == 3:                        # packed path: combine the 8 sublane partials
            s = jnp.sum(s, axis=-2, keepdims=True)
        mean = s * inv_n

        d = x - mean
        s2 = jnp.sum(d * d, axis=-1, keepdims=True)
        if x.ndim == 3:
            s2 = jnp.sum(s2, axis=-2, keepdims=True)
        var = s2 * inv_n

        inv_std = jax.lax.rsqrt(var + EPS)     # tiny (Bt, 1[, 1]) tile -> EUP
        o_ref[...] = (g * (d * inv_std) + b).astype(o_ref.dtype)

    return kernel


def dropnorm_forward(x, gamma, beta, *, training=True, mask_key=None, b_tile=512):
    """Reproduces DropNorm.forward.

    training=True : out = (gamma * normalize(x * mask / 0.5) + beta) * mask
    training=False: out = gamma * normalize(x) + beta
    The random mask (half ones, half zeros, permuted; feature-shaped, shared
    across the batch exactly like the PyTorch module) is generated from
    `mask_key` in plain JAX glue; all numeric work happens in the kernel.
    """
    B = x.shape[0]
    feat_shape = x.shape[1:]
    F = math.prod(feat_shape)
    assert F % 128 == 0, "flattened feature dim must be lane-aligned for this kernel"

    g_flat = gamma.reshape(F).astype(jnp.float32)
    b_flat = beta.reshape(F).astype(jnp.float32)

    if training:
        assert mask_key is not None, "training=True requires a mask_key"
        assert F % 2 == 0
        half = F // 2
        base = jnp.concatenate(
            [jnp.ones((half,), jnp.float32), jnp.zeros((half,), jnp.float32)]
        )
        perm = jax.random.permutation(mask_key, F)   # deterministic randperm (glue)
        mask = base[perm]
        # Fold dropout scale into the mask and the post-mask into gamma/beta (one-time
        # (1,F) glue work that removes per-tile full-width multiplies in the kernel).
        params = jnp.stack([mask * INV_P, g_flat * mask, b_flat * mask], axis=0)
    else:
        mask = None
        params = jnp.stack([g_flat, b_flat], axis=0)

    kernel = _make_dropnorm_kernel(training)
    n_rows = params.shape[0]

    packed = (B < 8) and (F % (8 * 128) == 0)
    if packed:
        # Tiny batch: pack each sample across 8 sublanes x (F/8) lanes -> full vregs.
        L = F // 8
        x_k = x.reshape(B, 8, L)
        p_k = params.reshape(n_rows, 8, L)
        grid = (B,)                                   # >=2 steps feeds both v7x TCs
        x_spec = pl.BlockSpec((1, 8, L), lambda i: (i, 0, 0))
        p_spec = pl.BlockSpec((n_rows, 8, L), lambda i: (0, 0, 0))
        out_struct = jax.ShapeDtypeStruct((B, 8, L), x.dtype)
    else:
        x_k = x.reshape(B, F)
        p_k = params
        if B <= 8:
            B_TILE = B
        else:
            # Size the tile so the grid has ~4 steps (>=2 so v7x's second TC gets work),
            # capped at b_tile rows (<= 2 MiB/block f32 at F=1024).
            assert b_tile % 8 == 0
            B_TILE = min(b_tile, max(8, _round_up(pl.cdiv(B, 4), 8)))
        grid = (pl.cdiv(B, B_TILE),)
        x_spec = pl.BlockSpec((B_TILE, F), lambda i: (i, 0))
        p_spec = pl.BlockSpec((n_rows, F), lambda i: (0, 0))
        out_struct = jax.ShapeDtypeStruct((B, F), x.dtype)

    itemsize = jnp.dtype(x.dtype).itemsize
    cost = pl.CostEstimate(
        flops=10 * B * F,
        transcendentals=B,
        bytes_accessed=2 * B * F * itemsize + params.size * 4,
    )
    compiler_params = pltpu.CompilerParams(
        dimension_semantics=("parallel",),            # rows independent; shards on v7x 2-TC
        vmem_limit_bytes=32 * 1024 * 1024,            # > v5e 16 MiB default, < v7x 64 MiB phys
    )

    out = pl.pallas_call(
        kernel,
        out_shape=out_struct,
        grid=grid,
        in_specs=[x_spec, p_spec],
        out_specs=x_spec,
        compiler_params=compiler_params,
        cost_estimate=cost,
    )(x_k, p_k)

    out = out.reshape(x.shape)
    mask_out = mask.reshape(feat_shape) if training else None
    return out, mask_out


def _reference(x, gamma, beta, prescale, postmask):
    # Pure-JAX reference of the PyTorch math (two-pass variance), for sanity check.
    B = x.shape[0]
    F = math.prod(x.shape[1:])
    xs = x.reshape(B, F).astype(jnp.float32) * prescale.reshape(1, F)
    mew = jnp.mean(xs, axis=-1, keepdims=True)
    sig2 = jnp.sum((xs - mew) ** 2, axis=-1, keepdims=True) / F
    norm = (xs - mew) / jnp.sqrt(sig2 + EPS)
    out = (gamma.reshape(1, F) * norm + beta.reshape(1, F)) * postmask.reshape(1, F)
    return out.reshape(x.shape)


if __name__ == "__main__":
    key = jax.random.PRNGKey(0)
    k_x, k_mask = jax.random.split(key)

    B, C, H, W = 2, 4, 16, 16
    x = jax.random.normal(k_x, (B, C, H, W), dtype=jnp.float32)

    # Parameters as in DropNorm.__init__(input_dim=(C, H, W)): gamma=ones, beta=zeros.
    input_dim = (C, H, W)
    gamma = jnp.ones(input_dim, dtype=jnp.float32)
    beta = jnp.zeros(input_dim, dtype=jnp.float32)

    # Training-mode forward (dropout -> normalize -> affine -> re-mask).
    out_train, mask = dropnorm_forward(x, gamma, beta, training=True, mask_key=k_mask)
    out_train = jax.block_until_ready(out_train)

    # Eval-mode forward (normalize -> affine).
    out_eval, _ = dropnorm_forward(x, gamma, beta, training=False)
    out_eval = jax.block_until_ready(out_eval)

    # Sanity check vs pure-JAX reference.
    F = C * H * W
    ref_train = _reference(x, gamma, beta, (mask.reshape(F) / P_DROP), mask.reshape(F))
    ref_eval = _reference(x, gamma, beta, jnp.ones(F), jnp.ones(F))
    assert jnp.allclose(out_train, ref_train, atol=1e-5, rtol=1e-5)
    assert jnp.allclose(out_eval, ref_eval, atol=1e-5, rtol=1e-5)

    print("KERNEL_OK")
</pallas_src>

<mosaic_0001>
module attributes {stable_mosaic.version = 11 : i64} {
  func.func @kernel(%arg0: i32, %arg1: memref<1x8x128xf32, #tpu.memory_space<vmem>>, %arg2: memref<3x8x128xf32, #tpu.memory_space<vmem>>, %arg3: memref<1x8x128xf32, #tpu.memory_space<vmem>>) attributes {dimension_semantics = [#tpu.dimension_semantics<parallel>], iteration_bounds = array<i64: 2>, scalar_prefetch = 0 : i64, scratch_operands = 0 : i64, tpu.core_type = #tpu.core_type<tc>, window_params = [{transform_indices = @transform_0, window_bounds = array<i64: 1, 8, 128>}, {pipeline_mode = #tpu.pipeline_mode<synchronous>, transform_indices = @transform_1, window_bounds = array<i64: 3, 8, 128>}, {transform_indices = @transform_2, window_bounds = array<i64: 1, 8, 128>}]} {
    %c0 = arith.constant 0 : index
    %c0_0 = arith.constant 0 : index
    %c0_1 = arith.constant 0 : index
    %0 = vector.load %arg1[%c0, %c0_0, %c0_1] : memref<1x8x128xf32, #tpu.memory_space<vmem>>, vector<1x8x128xf32>
    %c0_2 = arith.constant 0 : index
    %c0_3 = arith.constant 0 : index
    %c0_4 = arith.constant 0 : index
    %1 = vector.load %arg2[%c0_2, %c0_3, %c0_4] : memref<3x8x128xf32, #tpu.memory_space<vmem>>, vector<1x8x128xf32>
    %2 = arith.mulf %0, %1 : vector<1x8x128xf32>
    %c1 = arith.constant 1 : index
    %c0_5 = arith.constant 0 : index
    %c0_6 = arith.constant 0 : index
    %3 = vector.load %arg2[%c1, %c0_5, %c0_6] : memref<3x8x128xf32, #tpu.memory_space<vmem>>, vector<1x8x128xf32>
    %c2 = arith.constant 2 : index
    %c0_7 = arith.constant 0 : index
    %c0_8 = arith.constant 0 : index
    %4 = vector.load %arg2[%c2, %c0_7, %c0_8] : memref<3x8x128xf32, #tpu.memory_space<vmem>>, vector<1x8x128xf32>
    %cst = arith.constant dense<0.000000e+00> : vector<1x8xf32>
    %5 = vector.multi_reduction <add>, %2, %cst [2] : vector<1x8x128xf32> to vector<1x8xf32>
    %6 = vector.shape_cast %5 : vector<1x8xf32> to vector<1x8x1xf32>
    %cst_9 = arith.constant dense<0.000000e+00> : vector<1x1xf32>
    %7 = vector.multi_reduction <add>, %6, %cst_9 [1] : vector<1x8x1xf32> to vector<1x1xf32>
    %8 = vector.shape_cast %7 : vector<1x1xf32> to vector<1x1x1xf32>
    %cst_10 = arith.constant 9.765625E-4 : f32
    %9 = vector.broadcast %cst_10 : f32 to vector<1x1x1xf32>
    %10 = arith.mulf %8, %9 : vector<1x1x1xf32>
    %11 = vector.broadcast %10 : vector<1x1x1xf32> to vector<1x8x128xf32>
    %12 = arith.subf %2, %11 : vector<1x8x128xf32>
    %13 = arith.mulf %12, %12 : vector<1x8x128xf32>
    %cst_11 = arith.constant dense<0.000000e+00> : vector<1x8xf32>
    %14 = vector.multi_reduction <add>, %13, %cst_11 [2] : vector<1x8x128xf32> to vector<1x8xf32>
    %15 = vector.shape_cast %14 : vector<1x8xf32> to vector<1x8x1xf32>
    %cst_12 = arith.constant dense<0.000000e+00> : vector<1x1xf32>
    %16 = vector.multi_reduction <add>, %15, %cst_12 [1] : vector<1x8x1xf32> to vector<1x1xf32>
    %17 = vector.shape_cast %16 : vector<1x1xf32> to vector<1x1x1xf32>
    %cst_13 = arith.constant 9.765625E-4 : f32
    %18 = vector.broadcast %cst_13 : f32 to vector<1x1x1xf32>
    %19 = arith.mulf %17, %18 : vector<1x1x1xf32>
    %cst_14 = arith.constant 1.000000e-16 : f32
    %20 = vector.broadcast %cst_14 : f32 to vector<1x1x1xf32>
    %21 = arith.addf %19, %20 : vector<1x1x1xf32>
    %22 = math.rsqrt %21 : vector<1x1x1xf32>
    %23 = vector.broadcast %22 : vector<1x1x1xf32> to vector<1x8x128xf32>
    %24 = arith.mulf %12, %23 : vector<1x8x128xf32>
    %25 = arith.mulf %3, %24 : vector<1x8x128xf32>
    %26 = arith.addf %25, %4 : vector<1x8x128xf32>
    %c0_15 = arith.constant 0 : index
    %c0_16 = arith.constant 0 : index
    %c0_17 = arith.constant 0 : index
    %27 = vector.load %arg3[%c0_15, %c0_16, %c0_17] : memref<1x8x128xf32, #tpu.memory_space<vmem>>, vector<1x8x128xf32>
    tpu.vector_store %arg3[%c0_15, %c0_16, %c0_17], %26 {strides = array<i32>} : memref<1x8x128xf32, #tpu.memory_space<vmem>>, vector<1x8x128xf32>,
    return
  }
  func.func @transform_0(%arg0: i32) -> (i32, i32, i32) {
    %c0_i32 = arith.constant 0 : i32
    %c0_i32_0 = arith.constant 0 : i32
    %c0_i32_1 = arith.constant 0 : i32
    return %arg0, %c0_i32, %c0_i32_0 : i32, i32, i32
  }
  func.func @transform_1(%arg0: i32) -> (i32, i32, i32) {
    %c0_i32 = arith.constant 0 : i32
    %c0_i32_0 = arith.constant 0 : i32
    %c0_i32_1 = arith.constant 0 : i32
    %c0_i32_2 = arith.constant 0 : i32
    return %c0_i32, %c0_i32_0, %c0_i32_1 : i32, i32, i32
  }
  func.func @transform_2(%arg0: i32) -> (i32, i32, i32) {
    %c0_i32 = arith.constant 0 : i32
    %c0_i32_0 = arith.constant 0 : i32
    %c0_i32_1 = arith.constant 0 : i32
    return %arg0, %c0_i32, %c0_i32_0 : i32, i32, i32
  }
}

</mosaic_0001>

<llo_original>
// kernel: tpu_custom_call.1
$region0: #{tpu_custom_call.1}
  #allocation0 [shape = 'u32[]', space=smem, size = 0x4, offset = 0x4, fixed_abs, tag = 'smem constant byte address 0x4 - core index']
  #allocation1 [shape = 'u32[144,128]{1,0:T(1,128)}', space=vmem, size = 0x12000, scoped, tag = 'internal scratch']
  %s0 = inlined_call_operand.hbm [shape: f32[2,8,128], index: 0, kind: input, shape index: {}]
  %s1 = inlined_call_operand.hbm [shape: f32[3,8,128], index: 1, kind: input, shape index: {}]
  %s2 = inlined_call_operand.hbm [shape: f32[2,8,128], index: 2, kind: output, shape index: {}]
  %s3 = sld [smem:[#allocation0]]
  $region49: #{tpu_custom_call.1} parent=0
    _
  %s5 = ssub.s32 1, %s3
  %s6 = scalar_select 0, %s5, %s3
  $region1: #{tpu_custom_call.1} parent=0
    #allocation2 [shape = 'u8[8192]{0}', space=vmem, size = 0x2000, scoped, tag = 'input window, operand 0']
    #allocation3 [shape = 's32[2]{0}', space=sflag, size = 0x8, scoped, tag = 'scoped memory for tpu_custom_call.1']
    #allocation4 [shape = 's32[2]{0}', space=sflag, size = 0x8, scoped, tag = 'scoped memory for tpu_custom_call.1']
    #allocation5 [shape = 'u8[12288]{0}', space=vmem, size = 0x3000, scoped, tag = 'input window, operand 1, single buffered']
    #allocation6 [shape = 's32[1]{0}', space=sflag, size = 0x4, scoped, tag = 'scoped memory for tpu_custom_call.1']
    #allocation7 [shape = 'u8[8192]{0}', space=vmem, size = 0x2000, scoped, tag = 'output window, operand 0']
    %7 = vsyncpa [#allocation3], 0
    %s8 = scalar_lea.sflag [#allocation3], 1
    %9 = vsyncpa %s8, 0
    %10 = vsyncpa [#allocation6], 0
    %11 = vsyncpa [#allocation4], 0
    %s12 = scalar_lea.sflag [#allocation4], 1
    %13 = vsyncpa %s12, 0
    loop: start=0, step=1, limit=4
    $region2: #{tpu_custom_call.1} parent=1 // loop_pre_header
      _
    $region3: #{tpu_custom_call.1} parent=1 // loop_header
      %s15 = sphi 0, %s19
      %p16 = scmp.ge.s32.totalorder %s15, 4
      %s25 = sphi 0, %s27
      %s28 = sphi 0, %s25
      %s29 = sphi 0, %s28
      %s45 = sphi 0, %s29
      %s49 = sphi 0, %s49
      %s51 = sphi 0, %s49
      %s52 = sphi 0, %s51
      %s66 = sphi 0, %s52
      %s72 = sphi 0, %s74
      %s75 = sphi 0, %s72
      %s76 = sphi 0, %s75
      %s92 = sphi 0, %s76
    $region4: #{tpu_custom_call.1} parent=1 // loop_header_branch
      %18 = sbr.rel (%p16) target = $region8
    $region5: #{tpu_custom_call.1} parent=1 // loop_body
      %s20 = ssub.s32 %s15, 1
      %s21 = ssub.s32 %s15, 2
      %s22 = sadd.s32 %s15, 1
      %s23 = ssub.s32 %s15, %s22
      %p24 = scmp.eq.s32.totalorder %s23, 0
      %s26 = sadd.s32 %s25, 1
      %s27 = scalar_select %p24, %s25, %s26
      %p30 = pneg %p24
      %p31 = scmp.eq.s32.totalorder %s15, 1
      %p32 = por %p30, %p31
      %p33 = scmp.ne.s32.totalorder %s25, %s28
      %p34 = scmp.eq.s32.totalorder %s15, 0
      %p35 = por %p33, %p34
      %p36 = scmp.ne.s32.totalorder %s25, %s28
      %p37 = scmp.eq.s32.totalorder %s20, 1
      %p38 = por %p36, %p37
      %p39 = scmp.ne.s32.totalorder %s28, %s29
      %p40 = scmp.eq.s32.totalorder %s20, 0
      %p41 = por %p39, %p40
      %p42 = scmp.ne.s32.totalorder %s28, %s29
      %p43 = scmp.eq.s32.totalorder %s21, 1
      %p44 = por %p42, %p43
      %p46 = scmp.ne.s32.totalorder %s29, %s45
      %p47 = scmp.eq.s32.totalorder %s21, 0
      %p48 = por %p46, %p47
      %s50 = sadd.s32 %s49, 1
      %p53 = scmp.eq.s32.totalorder %s15, 1
      %p54 = scmp.ne.s32.totalorder %s49, %s51
      %p55 = scmp.eq.s32.totalorder %s15, 0
      %p56 = por %p54, %p55
      %p57 = scmp.ne.s32.totalorder %s49, %s51
      %p58 = scmp.eq.s32.totalorder %s20, 1
      %p59 = por %p57, %p58
      %p60 = scmp.ne.s32.totalorder %s51, %s52
      %p61 = scmp.eq.s32.totalorder %s20, 0
      %p62 = por %p60, %p61
      %p63 = scmp.ne.s32.totalorder %s51, %s52
      %p64 = scmp.eq.s32.totalorder %s21, 1
      %p65 = por %p63, %p64
      %p67 = scmp.ne.s32.totalorder %s52, %s66
      %p68 = scmp.eq.s32.totalorder %s21, 0
      %p69 = por %p67, %p68
      %s70 = ssub.s32 %s15, %s22
      %p71 = scmp.eq.s32.totalorder %s70, 0
      %s73 = sadd.s32 %s72, 1
      %s74 = scalar_select %p71, %s72, %s73
      %p77 = pneg %p71
      %p78 = scmp.eq.s32.totalorder %s15, 1
      %p79 = por %p77, %p78
      %p80 = scmp.ne.s32.totalorder %s72, %s75
      %p81 = scmp.eq.s32.totalorder %s15, 0
      %p82 = por %p80, %p81
      %p83 = scmp.ne.s32.totalorder %s72, %s75
      %p84 = scmp.eq.s32.totalorder %s20, 1
      %p85 = por %p83, %p84
      %p86 = scmp.ne.s32.totalorder %s75, %s76
      %p87 = scmp.eq.s32.totalorder %s20, 0
      %p88 = por %p86, %p87
      %p89 = scmp.ne.s32.totalorder %s75, %s76
      %p90 = scmp.eq.s32.totalorder %s21, 1
      %p91 = por %p89, %p90
      %p93 = scmp.ne.s32.totalorder %s76, %s92
      %p94 = scmp.eq.s32.totalorder %s21, 0
      %p95 = por %p93, %p94
      %p96 = scmp.le.s32.totalorder 1, %s15
      %p97 = scmp.lt.s32.totalorder %s15, 3
      %p98 = pnand %p96, %p97
      %p99 = pneg %p98
      // Predicated region
      $region9: #{tpu_custom_call.1} parent=5 // pred_check
        _
      $region10: #{tpu_custom_call.1} parent=5 // pred_check_branch
        %101 = sbr.rel (%p98) target = $region12
      $region11: #{tpu_custom_call.1} parent=5 // pred_region
        %s102 = ssub.s32 %s15, 1
        // Predicated region
        $region13: #{tpu_custom_call.1} parent=11 // pred_check
          %p103 = pneg %p62
        $region14: #{tpu_custom_call.1} parent=11 // pred_check_branch
          %105 = sbr.rel (%p103) target = $region16
        $region15: #{tpu_custom_call.1} parent=11 // pred_region
          %s107 = ssub.s32 384, 384
          %108 = vsyncadd [#allocation6], %s107
          %s109 = sshll.u32 [#allocation5], 4
          %s110 = int_to_ptr.vmem [resolvable:$true] %s109
          %115 = dma.hbm_to_vmem [thread:$0]  %s1, 384, %s110, [#allocation6], 128, 128, 8
        $region16: #{tpu_custom_call.1} parent=11 // pred_fallthru
          _
      $region12: #{tpu_custom_call.1} parent=5 // pred_fallthru
        _
      %p116 = scmp.lt.s32.totalorder %s15, 2
      // Predicated region
      $region17: #{tpu_custom_call.1} parent=5 // pred_check
        %p117 = pneg %p116
      $region18: #{tpu_custom_call.1} parent=5 // pred_check_branch
        %119 = sbr.rel (%p117) target = $region20
      $region19: #{tpu_custom_call.1} parent=5 // pred_region
        // Predicated region
        $region21: #{tpu_custom_call.1} parent=19 // pred_check
          %p120 = pneg %p35
        $region22: #{tpu_custom_call.1} parent=19 // pred_check_branch
          %122 = sbr.rel (%p120) target = $region24
        $region23: #{tpu_custom_call.1} parent=19 // pred_region
          %s123 = sand.u32 %s25, 1
          %s124 = scalar_lea.sflag [#allocation3], %s123
          %s125 = sand.u32 %s25, 1
          %s126 = smul.addr %s125, 8
          %s127 = scalar_lea.vmem [#allocation2], %s126
          %s129 = ssub.s32 128, 128
          %130 = vsyncadd %s124, %s129
          %s131 = smul.addr %s15, 128
          %s132 = scalar_lea.hbm %s0, %s131
          %s134 = sshll.u32 %s127, 4
          %s135 = int_to_ptr.vmem [resolvable:$true] %s134
          %137 = dma.hbm_to_vmem [thread:$0]  %s132, 128, %s135, %s124
        $region24: #{tpu_custom_call.1} parent=19 // pred_fallthru
          _
      $region20: #{tpu_custom_call.1} parent=5 // pred_fallthru
        _
      %p138 = scmp.le.s32.totalorder 1, %s15
      %p139 = scmp.lt.s32.totalorder %s15, 3
      %p140 = pnand %p138, %p139
      %p141 = pneg %p140
      // Predicated region
      $region25: #{tpu_custom_call.1} parent=5 // pred_check
        _
      $region26: #{tpu_custom_call.1} parent=5 // pred_check_branch
        %143 = sbr.rel (%p140) target = $region28
      $region27: #{tpu_custom_call.1} parent=5 // pred_region
        %s144 = ssub.s32 %s15, 1
        %s145 = sand.u32 %s28, 1
        %s146 = scalar_lea.sflag [#allocation3], %s145
        %s147 = sand.u32 %s28, 1
        %s148 = smul.addr %s147, 8
        %s149 = scalar_lea.vmem [#allocation2], %s148
        // Predicated region
        $region29: #{tpu_custom_call.1} parent=27 // pred_check
          %p150 = pneg %p41
        $region30: #{tpu_custom_call.1} parent=27 // pred_check_branch
          %152 = sbr.rel (%p150) target = $region32
        $region31: #{tpu_custom_call.1} parent=27 // pred_region
          %153 = dma.done %s146, 128
        $region32: #{tpu_custom_call.1} parent=27 // pred_fallthru
          _
        // Predicated region
        $region33: #{tpu_custom_call.1} parent=27 // pred_check
          %p154 = pneg %p62
        $region34: #{tpu_custom_call.1} parent=27 // pred_check_branch
          %156 = sbr.rel (%p154) target = $region36
        $region35: #{tpu_custom_call.1} parent=27 // pred_region
          %157 = dma.done [#allocation6], 384
        $region36: #{tpu_custom_call.1} parent=27 // pred_fallthru
          _
        %s158 = sand.u32 %s28, 1
        %s159 = scalar_lea.sflag [#allocation3], %s158
        %s160 = sand.u32 %s28, 1
        %s161 = smul.addr %s160, 8
        %s162 = scalar_lea.vmem [#allocation2], %s161
        %p163 = pneg %p41
        %p164 = pneg %p38
        %p165 = pneg %p62
        %p166 = pneg %p59
        %p167 = pneg %p88
        %p168 = pneg %p85
        %s169 = sand.u32 %s75, 1
        %s170 = scalar_lea.sflag [#allocation4], %s169
        %s171 = sand.u32 %s75, 1
        %s172 = smul.addr %s171, 8
        %s173 = scalar_lea.vmem [#allocation7], %s172
        %v174 = vld [vmem:[%s149] sm:$0xff]
        %v175 = vld [vmem:[#allocation5] sm:$0xff]
        %v176 = vmul.f32 %v174, %v175
        %s177 = scalar_lea.vmem [#allocation5], 8
        %v178 = vld [vmem:[%s177] sm:$0xff]
        %s179 = scalar_lea.vmem [#allocation5], 16
        %v180 = vld [vmem:[%s179] sm:$0xff]
        %181 = vadd.xlane.f32.xlu0 %v176
        %v182 = vpop.xlane.xlu0 %181
        %v183 = vrot.slane %v182, 4
        %v184 = vadd.f32 %v182, %v183
        %v185 = vrot.slane %v184, 2
        %v186 = vadd.f32 %v184, %v185
        %v187 = vrot.slane %v186, 1
        %v188 = vadd.f32 %v186, %v187
        %v189 = vmul.f32 %v188, 0.0009765625
        %v190 = vsub.f32 %v176, %v189
        %v191 = vmul.f32 %v190, %v190
        %192 = vadd.xlane.f32.xlu0 %v191
        %v193 = vpop.xlane.xlu0 %192
        %v194 = vrot.slane %v193, 4
        %v195 = vadd.f32 %v193, %v194
        %v196 = vrot.slane %v195, 2
        %v197 = vadd.f32 %v195, %v196
        %v198 = vrot.slane %v197, 1
        %v199 = vadd.f32 %v197, %v198
        %v200 = vmul.f32 %v199, 0.0009765625
        %v201 = vadd.f32 %v200, 1e-16
        %v202 = vrsqrt.pop %v201
        %v203 = vmul.f32 %v190, %v202
        %v204 = vmul.f32 %v178, %v203
        %v205 = vadd.f32 %v204, %v180
        %206 = vst [vmem:[%s173] sm:$0xff] %v205
        %s207 = sand.u32 %s75, 1
        %s208 = scalar_lea.sflag [#allocation4], %s207
        %s209 = sand.u32 %s75, 1
        %s210 = smul.addr %s209, 8
        %s211 = scalar_lea.vmem [#allocation7], %s210
        // Predicated region
        $region37: #{tpu_custom_call.1} parent=27 // pred_check
          %p212 = pneg %p85
        $region38: #{tpu_custom_call.1} parent=27 // pred_check_branch
          %214 = sbr.rel (%p212) target = $region40
        $region39: #{tpu_custom_call.1} parent=27 // pred_region
          %s216 = ssub.s32 128, 128
          %217 = vsyncadd %s208, %s216
          %s218 = smul.addr %s20, 128
          %s219 = scalar_lea.hbm %s2, %s218
          %s221 = sshll.u32 %s211, 4
          %s222 = int_to_ptr.vmem [resolvable:$true] %s221
          %224 = dma.vmem_to_hbm [thread:$0]  %s222, 128, %s219, %s208
        $region40: #{tpu_custom_call.1} parent=27 // pred_fallthru
          _
      $region28: #{tpu_custom_call.1} parent=5 // pred_fallthru
        _
      %p225 = scmp.le.s32.totalorder 2, %s15
      // Predicated region
      $region41: #{tpu_custom_call.1} parent=5 // pred_check
        %p226 = pneg %p225
      $region42: #{tpu_custom_call.1} parent=5 // pred_check_branch
        %228 = sbr.rel (%p226) target = $region44
      $region43: #{tpu_custom_call.1} parent=5 // pred_region
        %s229 = ssub.s32 %s15, 2
        // Predicated region
        $region45: #{tpu_custom_call.1} parent=43 // pred_check
          %p230 = pneg %p91
        $region46: #{tpu_custom_call.1} parent=43 // pred_check_branch
          %232 = sbr.rel (%p230) target = $region48
        $region47: #{tpu_custom_call.1} parent=43 // pred_region
          %s233 = sand.u32 %s76, 1
          %s234 = scalar_lea.sflag [#allocation4], %s233
          %s235 = sand.u32 %s76, 1
          %s236 = smul.addr %s235, 8
          %s237 = scalar_lea.vmem [#allocation7], %s236
          %238 = dma.done %s234, 128
        $region48: #{tpu_custom_call.1} parent=43 // pred_fallthru
          _
      $region44: #{tpu_custom_call.1} parent=5 // pred_fallthru
        _
    $region6: #{tpu_custom_call.1} parent=1 // loop_footer
      %s19 = sadd.s32 1, %s15
    $region7: #{tpu_custom_call.1} parent=1 // loop_footer_branch
      %14 = sbr.rel target = $region3
    $region8: #{tpu_custom_call.1} parent=1 // loop_exit
      _
    %239 = vsyncpa [#allocation3], 1
    %s240 = scalar_lea.sflag [#allocation3], 1
    %241 = vsyncpa %s240, 1
    %242 = vsyncpa [#allocation6], 1
    %243 = vsyncpa [#allocation4], 1
    %s244 = scalar_lea.sflag [#allocation4], 1
    %245 = vsyncpa %s244, 1

</llo_original>
